<compile_context>
chip_gen: v7x
topology: tpu7x:2x2x1
jax: 0.10.0
libtpu: 0.0.40
codegen_flags: <defaults>
</compile_context>

<pallas_src>
import functools

import jax
import jax.numpy as jnp
from jax.experimental import pallas as pl
from jax.experimental.pallas import tpu as pltpu

EPS = 1e-5


def _encoder_kernel(x_ref, w1_ref, w2_ref, bias_ref, bn_ref, o_ref, *, C, H1, H2, cps):
    """One grid step: `cps` channels, full batch, batch on the lane axis.

    x_ref:    (cps, L, B)  channel-major input, lane axis = batch
    w1_ref:   (H1, L)      resident weight 1
    w2_ref:   (H2, H1)     resident weight 2
    bias_ref: (Hmax, 2)    column 0 = b1, column 1 = b2
    bn_ref:   (4*C,) SMEM  [gamma1 | beta1 | gamma2 | beta2]
    o_ref:    (cps, H2, B)
    """
    step = pl.program_id(0)
    for cl in range(cps):                       # static, tiny (1-2 channels per step)
        c = step * cps + cl                     # global channel index (scalar)

        # ---- Linear(L -> H1): (H1, L) @ (L, B) -> (H1, B), lane-dense ----
        h1 = jnp.dot(w1_ref[...], x_ref[cl], preferred_element_type=jnp.float32)
        h1 = h1 + bias_ref[:H1, 0:1]

        # ---- BatchNorm1d(C): training-mode batch stats over (B, H1) of this channel,
        #      centered (two-pass) biased variance, affine folded into scale/shift ----
        m1 = jnp.mean(h1, keepdims=True)                    # (1, 1)
        d1 = h1 - m1
        v1 = jnp.mean(d1 * d1, keepdims=True)               # biased variance
        s1 = bn_ref[c] * jax.lax.rsqrt(v1 + EPS)            # gamma1[c] / sqrt(var+eps)
        a1 = jnp.tanh(d1 * s1 + bn_ref[C + c])
        # TODO(synk): Dropout(p) omitted (identity / eval mode); exact reproduction
        # would require matching PyTorch's RNG stream.

        # ---- Linear(H1 -> H2): (H2, H1) @ (H1, B) -> (H2, B) ----
        h2 = jnp.dot(w2_ref[...], a1, preferred_element_type=jnp.float32)
        h2 = h2 + bias_ref[:H2, 1:2]

        # ---- BatchNorm1d(C) -> ReLU ----
        m2 = jnp.mean(h2, keepdims=True)
        d2 = h2 - m2
        v2 = jnp.mean(d2 * d2, keepdims=True)
        s2 = bn_ref[2 * C + c] * jax.lax.rsqrt(v2 + EPS)
        o_ref[cl] = jnp.maximum(d2 * s2 + bn_ref[3 * C + c], 0.0).astype(o_ref.dtype)


def _round_up(n, m):
    return (n + m - 1) // m * m


@jax.jit
def encoder_forward_channel_major(x_clb, w1, b1, g1, be1, w2, b2, g2, be2):
    """Core entry point (no layout ops). x_clb: (C, L, B) -> returns (C, H2, B).

    Keeping activations channel-major with the batch on the last axis upstream makes
    this kernel transpose-free end to end.
    """
    C, L, B = x_clb.shape
    H1 = w1.shape[0]
    H2 = w2.shape[0]
    Hmax = max(H1, H2)

    # Grid: 2 "parallel" steps when C is even (keeps v7x's 2 TensorCores busy, halves
    # per-step overhead on single-TC v5e/v6e); otherwise fall back to one channel/step.
    steps = 2 if (C % 2 == 0 and C >= 2) else C
    cps = C // steps

    # Conservative VMEM guard (padded, double-buffered input + output blocks).
    blk_bytes = 4 * cps * _round_up(B, 128) * (_round_up(L, 8) + _round_up(H2, 8))
    if 2 * blk_bytes > 12 * 1024 * 1024:
        raise ValueError(
            "per-step VMEM footprint too large for a single-pass BatchNorm kernel; "
            "tile the batch with a two-pass BN reduction instead "
            f"(estimated {2 * blk_bytes / 2**20:.1f} MiB)")

    # Packed tiny parameters: linear biases as column vectors (broadcast over lanes),
    # per-channel BN affine params as SMEM scalars.
    bias_pack = jnp.zeros((Hmax, 2), jnp.float32)
    bias_pack = bias_pack.at[:H1, 0].set(b1.astype(jnp.float32))
    bias_pack = bias_pack.at[:H2, 1].set(b2.astype(jnp.float32))
    bn_pack = jnp.concatenate([g1, be1, g2, be2]).astype(jnp.float32)   # (4*C,)

    kernel = functools.partial(_encoder_kernel, C=C, H1=H1, H2=H2, cps=cps)
    return pl.pallas_call(
        kernel,
        grid=(steps,),
        in_specs=[
            pl.BlockSpec((cps, L, B), lambda i: (i, 0, 0)),      # this step's channels
            pl.BlockSpec((H1, L), lambda i: (0, 0)),             # resident weight 1
            pl.BlockSpec((H2, H1), lambda i: (0, 0)),            # resident weight 2
            pl.BlockSpec((Hmax, 2), lambda i: (0, 0)),           # packed linear biases
            pl.BlockSpec(memory_space=pltpu.MemorySpace.SMEM),   # packed gamma/beta
        ],
        out_specs=pl.BlockSpec((cps, H2, B), lambda i: (i, 0, 0)),
        out_shape=jax.ShapeDtypeStruct((C, H2, B), x_clb.dtype),
        compiler_params=pltpu.CompilerParams(
            dimension_semantics=("parallel",),                   # v7x: split steps on 2 TCs
        ),
    )(x_clb, w1, w2, bias_pack, bn_pack)


@jax.jit
def encoder_forward(x, w1, b1, g1, be1, w2, b2, g2, be2):
    """PyTorch-layout compatibility wrapper.

    x: (B, C, L); w1: (H1, L); b1: (H1,); w2: (H2, H1); b2: (H2,); g*/be*: (C,).
    Returns (B, C, H2). The two tiny transposes here exist only to honor the PyTorch
    layout contract; use `encoder_forward_channel_major` upstream to avoid them.
    """
    out_chb = encoder_forward_channel_major(
        jnp.transpose(x, (1, 2, 0)), w1, b1, g1, be1, w2, b2, g2, be2)   # (C, H2, B)
    return jnp.transpose(out_chb, (2, 0, 1))                             # (B, C, H2)


def encoder_reference(x, w1, b1, g1, be1, w2, b2, g2, be2):
    """Pure-JAX reference mirroring the PyTorch f32 forward (train-mode BN, eval dropout)."""
    hp = jax.lax.Precision.HIGHEST
    h1 = jnp.einsum("bcl,hl->bch", x, w1, precision=hp) + b1[None, None, :]
    m1 = jnp.mean(h1, axis=(0, 2), keepdims=True)
    v1 = jnp.mean((h1 - m1) ** 2, axis=(0, 2), keepdims=True)
    a1 = jnp.tanh((h1 - m1) / jnp.sqrt(v1 + EPS) * g1[None, :, None] + be1[None, :, None])
    h2 = jnp.einsum("bch,oh->bco", a1, w2, precision=hp) + b2[None, None, :]
    m2 = jnp.mean(h2, axis=(0, 2), keepdims=True)
    v2 = jnp.mean((h2 - m2) ** 2, axis=(0, 2), keepdims=True)
    return jnp.maximum(
        (h2 - m2) / jnp.sqrt(v2 + EPS) * g2[None, :, None] + be2[None, :, None], 0.0)


if __name__ == "__main__":
    # Module config: seq_len=16, n_features=4, layersizes=(12, 8), dropout_p=0.25.
    # One realistic training batch of windows is processed in a single kernel call.
    B, C, L = 256, 4, 16
    H1, H2 = 12, 8

    key = jax.random.PRNGKey(0)
    kx, kw1, kb1, kw2, kb2, kg1, kbe1, kg2, kbe2 = jax.random.split(key, 9)

    x = jax.random.normal(kx, (B, C, L), jnp.float32)
    w1 = jax.random.normal(kw1, (H1, L), jnp.float32) * 0.1
    b1 = jax.random.normal(kb1, (H1,), jnp.float32) * 0.1
    w2 = jax.random.normal(kw2, (H2, H1), jnp.float32) * 0.1
    b2 = jax.random.normal(kb2, (H2,), jnp.float32) * 0.1
    # Non-trivial BatchNorm affine params so the folded scale/shift path is exercised.
    g1 = 1.0 + 0.1 * jax.random.normal(kg1, (C,), jnp.float32)
    be1 = 0.1 * jax.random.normal(kbe1, (C,), jnp.float32)
    g2 = 1.0 + 0.1 * jax.random.normal(kg2, (C,), jnp.float32)
    be2 = 0.1 * jax.random.normal(kbe2, (C,), jnp.float32)

    out = encoder_forward(x, w1, b1, g1, be1, w2, b2, g2, be2)
    out = jax.block_until_ready(out)

    ref = encoder_reference(x, w1, b1, g1, be1, w2, b2, g2, be2)
    assert out.shape == (B, C, H2)
    # Kernel dots use the hardware-default MXU precision (HIGHEST dropped per review);
    # against the HIGHEST-precision f32 reference the worst plausible drift after the
    # BatchNorm normalizations is ~1e-2 (bf16 input rounding amplified by 1/std), so
    # compare at 2e-2 — still far tighter than any real layout/indexing/BN bug.
    assert jnp.allclose(out, ref, atol=2e-2, rtol=2e-2), "mismatch vs reference"

    print("KERNEL_OK")
</pallas_src>

<mosaic_0001>
module attributes {stable_mosaic.version = 11 : i64} {
  func.func @_encoder_kernel(%arg0: i32, %arg1: memref<2x16x256xf32, #tpu.memory_space<vmem>>, %arg2: memref<12x16xf32, #tpu.memory_space<vmem>>, %arg3: memref<8x12xf32, #tpu.memory_space<vmem>>, %arg4: memref<12x2xf32, #tpu.memory_space<vmem>>, %arg5: memref<16xf32, #tpu.memory_space<smem>>, %arg6: memref<2x8x256xf32, #tpu.memory_space<vmem>>) attributes {dimension_semantics = [#tpu.dimension_semantics<parallel>], iteration_bounds = array<i64: 2>, scalar_prefetch = 0 : i64, scratch_operands = 0 : i64, tpu.core_type = #tpu.core_type<tc>, window_params = [{transform_indices = @transform_0, window_bounds = array<i64: 2, 16, 256>}, {pipeline_mode = #tpu.pipeline_mode<synchronous>, transform_indices = @transform_1, window_bounds = array<i64: 12, 16>}, {pipeline_mode = #tpu.pipeline_mode<synchronous>, transform_indices = @transform_2, window_bounds = array<i64: 8, 12>}, {pipeline_mode = #tpu.pipeline_mode<synchronous>, transform_indices = @transform_3, window_bounds = array<i64: 12, 2>}, {transform_indices = @transform_4, window_bounds = array<i64: 16>}, {transform_indices = @transform_5, window_bounds = array<i64: 2, 8, 256>}]} {
    %c2_i32 = arith.constant 2 : i32
    %0 = arith.muli %arg0, %c2_i32 : i32
    %c0_i32 = arith.constant 0 : i32
    %1 = arith.addi %0, %c0_i32 : i32
    %c0 = arith.constant 0 : index
    %c0_0 = arith.constant 0 : index
    %2 = vector.load %arg2[%c0, %c0_0] : memref<12x16xf32, #tpu.memory_space<vmem>>, vector<12x16xf32>
    %c0_1 = arith.constant 0 : index
    %c0_2 = arith.constant 0 : index
    %c0_3 = arith.constant 0 : index
    %3 = vector.load %arg1[%c0_1, %c0_2, %c0_3] : memref<2x16x256xf32, #tpu.memory_space<vmem>>, vector<1x16x256xf32>
    %4 = vector.shape_cast %3 : vector<1x16x256xf32> to vector<16x256xf32>
    %cst = arith.constant dense<0.000000e+00> : vector<12x256xf32>
    %5 = tpu.matmul %2, %4, %cst {dimension_numbers = #tpu.dot_dimension_numbers<[1], [0], [0], [1], [0, 0, 1, 1], [], []>} : vector<12x16xf32>, vector<16x256xf32>, vector<12x256xf32> -> vector<12x256xf32>
    %c0_4 = arith.constant 0 : index
    %c0_5 = arith.constant 0 : index
    %6 = vector.load %arg4[%c0_4, %c0_5] : memref<12x2xf32, #tpu.memory_space<vmem>>, vector<12x1xf32>
    %7 = vector.broadcast %6 : vector<12x1xf32> to vector<12x256xf32>
    %8 = arith.addf %5, %7 : vector<12x256xf32>
    %9 = vector.shape_cast %8 : vector<12x256xf32> to vector<1x12x256xf32>
    %cst_6 = arith.constant dense<0.000000e+00> : vector<1xf32>
    %10 = vector.multi_reduction <add>, %9, %cst_6 [1, 2] : vector<1x12x256xf32> to vector<1xf32>
    %11 = vector.shape_cast %10 : vector<1xf32> to vector<1x1x1xf32>
    %12 = vector.extract %11[0, 0, 0] : f32 from vector<1x1x1xf32>
    %13 = vector.broadcast %12 : f32 to vector<1x1xf32>
    %cst_7 = arith.constant 3.072000e+03 : f32
    %14 = vector.broadcast %cst_7 : f32 to vector<1x1xf32>
    %15 = arith.divf %13, %14 : vector<1x1xf32>
    %16 = vector.broadcast %15 : vector<1x1xf32> to vector<12x256xf32>
    %17 = arith.subf %8, %16 : vector<12x256xf32>
    %18 = arith.mulf %17, %17 : vector<12x256xf32>
    %19 = vector.shape_cast %18 : vector<12x256xf32> to vector<1x12x256xf32>
    %cst_8 = arith.constant dense<0.000000e+00> : vector<1xf32>
    %20 = vector.multi_reduction <add>, %19, %cst_8 [1, 2] : vector<1x12x256xf32> to vector<1xf32>
    %21 = vector.shape_cast %20 : vector<1xf32> to vector<1x1x1xf32>
    %22 = vector.extract %21[0, 0, 0] : f32 from vector<1x1x1xf32>
    %23 = vector.broadcast %22 : f32 to vector<1x1xf32>
    %cst_9 = arith.constant 3.072000e+03 : f32
    %24 = vector.broadcast %cst_9 : f32 to vector<1x1xf32>
    %25 = arith.divf %23, %24 : vector<1x1xf32>
    %26 = arith.index_cast %1 : i32 to index
    %27 = memref.load %arg5[%26] : memref<16xf32, #tpu.memory_space<smem>>
    %cst_10 = arith.constant 9.99999974E-6 : f32
    %28 = vector.broadcast %cst_10 : f32 to vector<1x1xf32>
    %29 = arith.addf %25, %28 : vector<1x1xf32>
    %30 = math.rsqrt %29 : vector<1x1xf32>
    %31 = vector.broadcast %27 : f32 to vector<1x1xf32>
    %32 = arith.mulf %31, %30 : vector<1x1xf32>
    %33 = vector.broadcast %32 : vector<1x1xf32> to vector<12x256xf32>
    %34 = arith.mulf %17, %33 : vector<12x256xf32>
    %c4_i32 = arith.constant 4 : i32
    %35 = arith.addi %c4_i32, %1 : i32
    %36 = arith.index_cast %35 : i32 to index
    %37 = memref.load %arg5[%36] : memref<16xf32, #tpu.memory_space<smem>>
    %38 = vector.broadcast %37 : f32 to vector<12x256xf32>
    %39 = arith.addf %34, %38 : vector<12x256xf32>
    %40 = math.tanh %39 : vector<12x256xf32>
    %c0_11 = arith.constant 0 : index
    %c0_12 = arith.constant 0 : index
    %41 = vector.load %arg3[%c0_11, %c0_12] : memref<8x12xf32, #tpu.memory_space<vmem>>, vector<8x12xf32>
    %cst_13 = arith.constant dense<0.000000e+00> : vector<8x256xf32>
    %42 = tpu.matmul %41, %40, %cst_13 {dimension_numbers = #tpu.dot_dimension_numbers<[1], [0], [0], [1], [0, 0, 1, 1], [], []>} : vector<8x12xf32>, vector<12x256xf32>, vector<8x256xf32> -> vector<8x256xf32>
    %c0_14 = arith.constant 0 : index
    %c1 = arith.constant 1 : index
    %43 = vector.load %arg4[%c0_14, %c1] : memref<12x2xf32, #tpu.memory_space<vmem>>, vector<8x1xf32>
    %44 = vector.broadcast %43 : vector<8x1xf32> to vector<8x256xf32>
    %45 = arith.addf %42, %44 : vector<8x256xf32>
    %46 = vector.shape_cast %45 : vector<8x256xf32> to vector<1x8x256xf32>
    %cst_15 = arith.constant dense<0.000000e+00> : vector<1xf32>
    %47 = vector.multi_reduction <add>, %46, %cst_15 [1, 2] : vector<1x8x256xf32> to vector<1xf32>
    %48 = vector.shape_cast %47 : vector<1xf32> to vector<1x1x1xf32>
    %49 = vector.extract %48[0, 0, 0] : f32 from vector<1x1x1xf32>
    %50 = vector.broadcast %49 : f32 to vector<1x1xf32>
    %cst_16 = arith.constant 2.048000e+03 : f32
    %51 = vector.broadcast %cst_16 : f32 to vector<1x1xf32>
    %52 = arith.divf %50, %51 : vector<1x1xf32>
    %53 = vector.broadcast %52 : vector<1x1xf32> to vector<8x256xf32>
    %54 = arith.subf %45, %53 : vector<8x256xf32>
    %55 = arith.mulf %54, %54 : vector<8x256xf32>
    %56 = vector.shape_cast %55 : vector<8x256xf32> to vector<1x8x256xf32>
    %cst_17 = arith.constant dense<0.000000e+00> : vector<1xf32>
    %57 = vector.multi_reduction <add>, %56, %cst_17 [1, 2] : vector<1x8x256xf32> to vector<1xf32>
    %58 = vector.shape_cast %57 : vector<1xf32> to vector<1x1x1xf32>
    %59 = vector.extract %58[0, 0, 0] : f32 from vector<1x1x1xf32>
    %60 = vector.broadcast %59 : f32 to vector<1x1xf32>
    %cst_18 = arith.constant 2.048000e+03 : f32
    %61 = vector.broadcast %cst_18 : f32 to vector<1x1xf32>
    %62 = arith.divf %60, %61 : vector<1x1xf32>
    %c8_i32 = arith.constant 8 : i32
    %63 = arith.addi %c8_i32, %1 : i32
    %64 = arith.index_cast %63 : i32 to index
    %65 = memref.load %arg5[%64] : memref<16xf32, #tpu.memory_space<smem>>
    %cst_19 = arith.constant 9.99999974E-6 : f32
    %66 = vector.broadcast %cst_19 : f32 to vector<1x1xf32>
    %67 = arith.addf %62, %66 : vector<1x1xf32>
    %68 = math.rsqrt %67 : vector<1x1xf32>
    %69 = vector.broadcast %65 : f32 to vector<1x1xf32>
    %70 = arith.mulf %69, %68 : vector<1x1xf32>
    %71 = vector.broadcast %70 : vector<1x1xf32> to vector<8x256xf32>
    %72 = arith.mulf %54, %71 : vector<8x256xf32>
    %c12_i32 = arith.constant 12 : i32
    %73 = arith.addi %c12_i32, %1 : i32
    %74 = arith.index_cast %73 : i32 to index
    %75 = memref.load %arg5[%74] : memref<16xf32, #tpu.memory_space<smem>>
    %76 = vector.broadcast %75 : f32 to vector<8x256xf32>
    %77 = arith.addf %72, %76 : vector<8x256xf32>
    %cst_20 = arith.constant 0.000000e+00 : f32
    %78 = vector.broadcast %cst_20 : f32 to vector<8x256xf32>
    %79 = arith.maximumf %77, %78 : vector<8x256xf32>
    %c0_21 = arith.constant 0 : index
    %c0_22 = arith.constant 0 : index
    %c0_23 = arith.constant 0 : index
    %80 = vector.load %arg6[%c0_21, %c0_22, %c0_23] : memref<2x8x256xf32, #tpu.memory_space<vmem>>, vector<1x8x256xf32>
    %81 = vector.shape_cast %80 : vector<1x8x256xf32> to vector<8x256xf32>
    %82 = vector.shape_cast %79 : vector<8x256xf32> to vector<1x8x256xf32>
    tpu.vector_store %arg6[%c0_21, %c0_22, %c0_23], %82 {strides = array<i32>} : memref<2x8x256xf32, #tpu.memory_space<vmem>>, vector<1x8x256xf32>,
    %c2_i32_24 = arith.constant 2 : i32
    %83 = arith.muli %arg0, %c2_i32_24 : i32
    %c1_i32 = arith.constant 1 : i32
    %84 = arith.addi %83, %c1_i32 : i32
    %c0_25 = arith.constant 0 : index
    %c0_26 = arith.constant 0 : index
    %85 = vector.load %arg2[%c0_25, %c0_26] : memref<12x16xf32, #tpu.memory_space<vmem>>, vector<12x16xf32>
    %c1_27 = arith.constant 1 : index
    %c0_28 = arith.constant 0 : index
    %c0_29 = arith.constant 0 : index
    %86 = vector.load %arg1[%c1_27, %c0_28, %c0_29] : memref<2x16x256xf32, #tpu.memory_space<vmem>>, vector<1x16x256xf32>
    %87 = vector.shape_cast %86 : vector<1x16x256xf32> to vector<16x256xf32>
    %cst_30 = arith.constant dense<0.000000e+00> : vector<12x256xf32>
    %88 = tpu.matmul %85, %87, %cst_30 {dimension_numbers = #tpu.dot_dimension_numbers<[1], [0], [0], [1], [0, 0, 1, 1], [], []>} : vector<12x16xf32>, vector<16x256xf32>, vector<12x256xf32> -> vector<12x256xf32>
    %c0_31 = arith.constant 0 : index
    %c0_32 = arith.constant 0 : index
    %89 = vector.load %arg4[%c0_31, %c0_32] : memref<12x2xf32, #tpu.memory_space<vmem>>, vector<12x1xf32>
    %90 = vector.broadcast %89 : vector<12x1xf32> to vector<12x256xf32>
    %91 = arith.addf %88, %90 : vector<12x256xf32>
    %92 = vector.shape_cast %91 : vector<12x256xf32> to vector<1x12x256xf32>
    %cst_33 = arith.constant dense<0.000000e+00> : vector<1xf32>
    %93 = vector.multi_reduction <add>, %92, %cst_33 [1, 2] : vector<1x12x256xf32> to vector<1xf32>
    %94 = vector.shape_cast %93 : vector<1xf32> to vector<1x1x1xf32>
    %95 = vector.extract %94[0, 0, 0] : f32 from vector<1x1x1xf32>
    %96 = vector.broadcast %95 : f32 to vector<1x1xf32>
    %cst_34 = arith.constant 3.072000e+03 : f32
    %97 = vector.broadcast %cst_34 : f32 to vector<1x1xf32>
    %98 = arith.divf %96, %97 : vector<1x1xf32>
    %99 = vector.broadcast %98 : vector<1x1xf32> to vector<12x256xf32>
    %100 = arith.subf %91, %99 : vector<12x256xf32>
    %101 = arith.mulf %100, %100 : vector<12x256xf32>
    %102 = vector.shape_cast %101 : vector<12x256xf32> to vector<1x12x256xf32>
    %cst_35 = arith.constant dense<0.000000e+00> : vector<1xf32>
    %103 = vector.multi_reduction <add>, %102, %cst_35 [1, 2] : vector<1x12x256xf32> to vector<1xf32>
    %104 = vector.shape_cast %103 : vector<1xf32> to vector<1x1x1xf32>
    %105 = vector.extract %104[0, 0, 0] : f32 from vector<1x1x1xf32>
    %106 = vector.broadcast %105 : f32 to vector<1x1xf32>
    %cst_36 = arith.constant 3.072000e+03 : f32
    %107 = vector.broadcast %cst_36 : f32 to vector<1x1xf32>
    %108 = arith.divf %106, %107 : vector<1x1xf32>
    %109 = arith.index_cast %84 : i32 to index
    %110 = memref.load %arg5[%109] : memref<16xf32, #tpu.memory_space<smem>>
    %cst_37 = arith.constant 9.99999974E-6 : f32
    %111 = vector.broadcast %cst_37 : f32 to vector<1x1xf32>
    %112 = arith.addf %108, %111 : vector<1x1xf32>
    %113 = math.rsqrt %112 : vector<1x1xf32>
    %114 = vector.broadcast %110 : f32 to vector<1x1xf32>
    %115 = arith.mulf %114, %113 : vector<1x1xf32>
    %116 = vector.broadcast %115 : vector<1x1xf32> to vector<12x256xf32>
    %117 = arith.mulf %100, %116 : vector<12x256xf32>
    %c4_i32_38 = arith.constant 4 : i32
    %118 = arith.addi %c4_i32_38, %84 : i32
    %119 = arith.index_cast %118 : i32 to index
    %120 = memref.load %arg5[%119] : memref<16xf32, #tpu.memory_space<smem>>
    %121 = vector.broadcast %120 : f32 to vector<12x256xf32>
    %122 = arith.addf %117, %121 : vector<12x256xf32>
    %123 = math.tanh %122 : vector<12x256xf32>
    %c0_39 = arith.constant 0 : index
    %c0_40 = arith.constant 0 : index
    %124 = vector.load %arg3[%c0_39, %c0_40] : memref<8x12xf32, #tpu.memory_space<vmem>>, vector<8x12xf32>
    %cst_41 = arith.constant dense<0.000000e+00> : vector<8x256xf32>
    %125 = tpu.matmul %124, %123, %cst_41 {dimension_numbers = #tpu.dot_dimension_numbers<[1], [0], [0], [1], [0, 0, 1, 1], [], []>} : vector<8x12xf32>, vector<12x256xf32>, vector<8x256xf32> -> vector<8x256xf32>
    %c0_42 = arith.constant 0 : index
    %c1_43 = arith.constant 1 : index
    %126 = vector.load %arg4[%c0_42, %c1_43] : memref<12x2xf32, #tpu.memory_space<vmem>>, vector<8x1xf32>
    %127 = vector.broadcast %126 : vector<8x1xf32> to vector<8x256xf32>
    %128 = arith.addf %125, %127 : vector<8x256xf32>
    %129 = vector.shape_cast %128 : vector<8x256xf32> to vector<1x8x256xf32>
    %cst_44 = arith.constant dense<0.000000e+00> : vector<1xf32>
    %130 = vector.multi_reduction <add>, %129, %cst_44 [1, 2] : vector<1x8x256xf32> to vector<1xf32>
    %131 = vector.shape_cast %130 : vector<1xf32> to vector<1x1x1xf32>
    %132 = vector.extract %131[0, 0, 0] : f32 from vector<1x1x1xf32>
    %133 = vector.broadcast %132 : f32 to vector<1x1xf32>
    %cst_45 = arith.constant 2.048000e+03 : f32
    %134 = vector.broadcast %cst_45 : f32 to vector<1x1xf32>
    %135 = arith.divf %133, %134 : vector<1x1xf32>
    %136 = vector.broadcast %135 : vector<1x1xf32> to vector<8x256xf32>
    %137 = arith.subf %128, %136 : vector<8x256xf32>
    %138 = arith.mulf %137, %137 : vector<8x256xf32>
    %139 = vector.shape_cast %138 : vector<8x256xf32> to vector<1x8x256xf32>
    %cst_46 = arith.constant dense<0.000000e+00> : vector<1xf32>
    %140 = vector.multi_reduction <add>, %139, %cst_46 [1, 2] : vector<1x8x256xf32> to vector<1xf32>
    %141 = vector.shape_cast %140 : vector<1xf32> to vector<1x1x1xf32>
    %142 = vector.extract %141[0, 0, 0] : f32 from vector<1x1x1xf32>
    %143 = vector.broadcast %142 : f32 to vector<1x1xf32>
    %cst_47 = arith.constant 2.048000e+03 : f32
    %144 = vector.broadcast %cst_47 : f32 to vector<1x1xf32>
    %145 = arith.divf %143, %144 : vector<1x1xf32>
    %c8_i32_48 = arith.constant 8 : i32
    %146 = arith.addi %c8_i32_48, %84 : i32
    %147 = arith.index_cast %146 : i32 to index
    %148 = memref.load %arg5[%147] : memref<16xf32, #tpu.memory_space<smem>>
    %cst_49 = arith.constant 9.99999974E-6 : f32
    %149 = vector.broadcast %cst_49 : f32 to vector<1x1xf32>
    %150 = arith.addf %145, %149 : vector<1x1xf32>
    %151 = math.rsqrt %150 : vector<1x1xf32>
    %152 = vector.broadcast %148 : f32 to vector<1x1xf32>
    %153 = arith.mulf %152, %151 : vector<1x1xf32>
    %154 = vector.broadcast %153 : vector<1x1xf32> to vector<8x256xf32>
    %155 = arith.mulf %137, %154 : vector<8x256xf32>
    %c12_i32_50 = arith.constant 12 : i32
    %156 = arith.addi %c12_i32_50, %84 : i32
    %157 = arith.index_cast %156 : i32 to index
    %158 = memref.load %arg5[%157] : memref<16xf32, #tpu.memory_space<smem>>
    %159 = vector.broadcast %158 : f32 to vector<8x256xf32>
    %160 = arith.addf %155, %159 : vector<8x256xf32>
    %cst_51 = arith.constant 0.000000e+00 : f32
    %161 = vector.broadcast %cst_51 : f32 to vector<8x256xf32>
    %162 = arith.maximumf %160, %161 : vector<8x256xf32>
    %c1_52 = arith.constant 1 : index
    %c0_53 = arith.constant 0 : index
    %c0_54 = arith.constant 0 : index
    %163 = vector.load %arg6[%c1_52, %c0_53, %c0_54] : memref<2x8x256xf32, #tpu.memory_space<vmem>>, vector<1x8x256xf32>
    %164 = vector.shape_cast %163 : vector<1x8x256xf32> to vector<8x256xf32>
    %165 = vector.shape_cast %162 : vector<8x256xf32> to vector<1x8x256xf32>
    tpu.vector_store %arg6[%c1_52, %c0_53, %c0_54], %165 {strides = array<i32>} : memref<2x8x256xf32, #tpu.memory_space<vmem>>, vector<1x8x256xf32>,
    return
  }
  func.func @transform_0(%arg0: i32) -> (i32, i32, i32) {
    %c0_i32 = arith.constant 0 : i32
    %c0_i32_0 = arith.constant 0 : i32
    %c0_i32_1 = arith.constant 0 : i32
    return %arg0, %c0_i32, %c0_i32_0 : i32, i32, i32
  }
  func.func @transform_1(%arg0: i32) -> (i32, i32) {
    %c0_i32 = arith.constant 0 : i32
    %c0_i32_0 = arith.constant 0 : i32
    %c0_i32_1 = arith.constant 0 : i32
    return %c0_i32, %c0_i32_0 : i32, i32
  }
  func.func @transform_2(%arg0: i32) -> (i32, i32) {
    %c0_i32 = arith.constant 0 : i32
    %c0_i32_0 = arith.constant 0 : i32
    %c0_i32_1 = arith.constant 0 : i32
    return %c0_i32, %c0_i32_0 : i32, i32
  }
  func.func @transform_3(%arg0: i32) -> (i32, i32) {
    %c0_i32 = arith.constant 0 : i32
    %c0_i32_0 = arith.constant 0 : i32
    %c0_i32_1 = arith.constant 0 : i32
    return %c0_i32, %c0_i32_0 : i32, i32
  }
  func.func @transform_4(%arg0: i32) -> i32 {
    %c0_i32 = arith.constant 0 : i32
    %c0_i32_0 = arith.constant 0 : i32
    return %c0_i32 : i32
  }
  func.func @transform_5(%arg0: i32) -> (i32, i32, i32) {
    %c0_i32 = arith.constant 0 : i32
    %c0_i32_0 = arith.constant 0 : i32
    %c0_i32_1 = arith.constant 0 : i32
    return %arg0, %c0_i32, %c0_i32_0 : i32, i32, i32
  }
}

</mosaic_0001>

<llo_original>
// kernel: encoder_forward_channel_major.1
$region0: #{encoder_forward_channel_major.1}
  #allocation0 [shape = 'u32[]', space=smem, size = 0x4, offset = 0x4, fixed_abs, tag = 'smem constant byte address 0x4 - core index']
  #allocation1 [shape = 'u32[144,128]{1,0:T(1,128)}', space=vmem, size = 0x12000, scoped, tag = 'internal scratch']
  %s0 = inlined_call_operand.hbm [shape: f32[4,16,256], index: 0, kind: input, shape index: {}]
  %s1 = inlined_call_operand.vmem [shape: f32[12,16], index: 1, kind: input, shape index: {}]
  %s2 = inlined_call_operand.vmem [shape: f32[8,12], index: 2, kind: input, shape index: {}]
  %s3 = inlined_call_operand.vmem [shape: f32[12,2], index: 3, kind: input, shape index: {}]
  %s4 = inlined_call_operand.vmem [shape: f32[16], index: 4, kind: input, shape index: {}]
  %s5 = inlined_call_operand.hbm [shape: f32[4,8,256], index: 5, kind: output, shape index: {}]
  %s6 = sld [smem:[#allocation0]]
  $region61: #{encoder_forward_channel_major.1} parent=0
    _
  %s8 = ssub.s32 1, %s6
  %s9 = scalar_select 0, %s8, %s6
  $region1: #{encoder_forward_channel_major.1} parent=0
    #allocation2 [shape = 'u8[65536]{0}', space=vmem, size = 0x10000, scoped, tag = 'input window, operand 0']
    #allocation3 [shape = 's32[2]{0}', space=sflag, size = 0x8, scoped, tag = 'scoped memory for encoder_forward_channel_major.1']
    #allocation4 [shape = 's32[2]{0}', space=sflag, size = 0x8, scoped, tag = 'scoped memory for encoder_forward_channel_major.1']
    #allocation5 [shape = 's32[2]{0}', space=sflag, size = 0x8, scoped, tag = 'scoped memory for encoder_forward_channel_major.1']
    #allocation6 [shape = 'u8[512]{0}', space=smem, size = 0x200, scoped, tag = 'input window, operand 4, single buffered']
    #allocation7 [shape = 'u8[32768]{0}', space=vmem, size = 0x8000, scoped, tag = 'output window, operand 0']
    %10 = vsyncpa [#allocation3], 0
    %s11 = scalar_lea.sflag [#allocation3], 1
    %12 = vsyncpa %s11, 0
    %13 = vsyncpa [#allocation5], 0
    %14 = vsyncpa [#allocation4], 0
    %s15 = scalar_lea.sflag [#allocation4], 1
    %16 = vsyncpa %s15, 0
    loop: start=0, step=1, limit=4
    $region2: #{encoder_forward_channel_major.1} parent=1 // loop_pre_header
      _
    $region3: #{encoder_forward_channel_major.1} parent=1 // loop_header
      %s18 = sphi 0, %s22
      %p19 = scmp.ge.s32.totalorder %s18, 4
      %s28 = sphi 0, %s30
      %s31 = sphi 0, %s28
      %s32 = sphi 0, %s31
      %s48 = sphi 0, %s32
      %s52 = sphi 0, %s52
      %s54 = sphi 0, %s52
      %s55 = sphi 0, %s54
      %s69 = sphi 0, %s55
      %s73 = sphi 0, %s73
      %s75 = sphi 0, %s73
      %s76 = sphi 0, %s75
      %s90 = sphi 0, %s76
      %s94 = sphi 0, %s94
      %s96 = sphi 0, %s94
      %s97 = sphi 0, %s96
      %s111 = sphi 0, %s97
      %s115 = sphi 0, %s115
      %s117 = sphi 0, %s115
      %s118 = sphi 0, %s117
      %s132 = sphi 0, %s118
      %s138 = sphi 0, %s140
      %s141 = sphi 0, %s138
      %s142 = sphi 0, %s141
      %s158 = sphi 0, %s142
    $region4: #{encoder_forward_channel_major.1} parent=1 // loop_header_branch
      %21 = sbr.rel (%p19) target = $region8
    $region5: #{encoder_forward_channel_major.1} parent=1 // loop_body
      %s23 = ssub.s32 %s18, 1
      %s24 = ssub.s32 %s18, 2
      %s25 = sadd.s32 %s18, 1
      %s26 = ssub.s32 %s18, %s25
      %p27 = scmp.eq.s32.totalorder %s26, 0
      %s29 = sadd.s32 %s28, 1
      %s30 = scalar_select %p27, %s28, %s29
      %p33 = pneg %p27
      %p34 = scmp.eq.s32.totalorder %s18, 1
      %p35 = por %p33, %p34
      %p36 = scmp.ne.s32.totalorder %s28, %s31
      %p37 = scmp.eq.s32.totalorder %s18, 0
      %p38 = por %p36, %p37
      %p39 = scmp.ne.s32.totalorder %s28, %s31
      %p40 = scmp.eq.s32.totalorder %s23, 1
      %p41 = por %p39, %p40
      %p42 = scmp.ne.s32.totalorder %s31, %s32
      %p43 = scmp.eq.s32.totalorder %s23, 0
      %p44 = por %p42, %p43
      %p45 = scmp.ne.s32.totalorder %s31, %s32
      %p46 = scmp.eq.s32.totalorder %s24, 1
      %p47 = por %p45, %p46
      %p49 = scmp.ne.s32.totalorder %s32, %s48
      %p50 = scmp.eq.s32.totalorder %s24, 0
      %p51 = por %p49, %p50
      %s53 = sadd.s32 %s52, 1
      %p56 = scmp.eq.s32.totalorder %s18, 1
      %p57 = scmp.ne.s32.totalorder %s52, %s54
      %p58 = scmp.eq.s32.totalorder %s18, 0
      %p59 = por %p57, %p58
      %p60 = scmp.ne.s32.totalorder %s52, %s54
      %p61 = scmp.eq.s32.totalorder %s23, 1
      %p62 = por %p60, %p61
      %p63 = scmp.ne.s32.totalorder %s54, %s55
      %p64 = scmp.eq.s32.totalorder %s23, 0
      %p65 = por %p63, %p64
      %p66 = scmp.ne.s32.totalorder %s54, %s55
      %p67 = scmp.eq.s32.totalorder %s24, 1
      %p68 = por %p66, %p67
      %p70 = scmp.ne.s32.totalorder %s55, %s69
      %p71 = scmp.eq.s32.totalorder %s24, 0
      %p72 = por %p70, %p71
      %s74 = sadd.s32 %s73, 1
      %p77 = scmp.eq.s32.totalorder %s18, 1
      %p78 = scmp.ne.s32.totalorder %s73, %s75
      %p79 = scmp.eq.s32.totalorder %s18, 0
      %p80 = por %p78, %p79
      %p81 = scmp.ne.s32.totalorder %s73, %s75
      %p82 = scmp.eq.s32.totalorder %s23, 1
      %p83 = por %p81, %p82
      %p84 = scmp.ne.s32.totalorder %s75, %s76
      %p85 = scmp.eq.s32.totalorder %s23, 0
      %p86 = por %p84, %p85
      %p87 = scmp.ne.s32.totalorder %s75, %s76
      %p88 = scmp.eq.s32.totalorder %s24, 1
      %p89 = por %p87, %p88
      %p91 = scmp.ne.s32.totalorder %s76, %s90
      %p92 = scmp.eq.s32.totalorder %s24, 0
      %p93 = por %p91, %p92
      %s95 = sadd.s32 %s94, 1
      %p98 = scmp.eq.s32.totalorder %s18, 1
      %p99 = scmp.ne.s32.totalorder %s94, %s96
      %p100 = scmp.eq.s32.totalorder %s18, 0
      %p101 = por %p99, %p100
      %p102 = scmp.ne.s32.totalorder %s94, %s96
      %p103 = scmp.eq.s32.totalorder %s23, 1
      %p104 = por %p102, %p103
      %p105 = scmp.ne.s32.totalorder %s96, %s97
      %p106 = scmp.eq.s32.totalorder %s23, 0
      %p107 = por %p105, %p106
      %p108 = scmp.ne.s32.totalorder %s96, %s97
      %p109 = scmp.eq.s32.totalorder %s24, 1
      %p110 = por %p108, %p109
      %p112 = scmp.ne.s32.totalorder %s97, %s111
      %p113 = scmp.eq.s32.totalorder %s24, 0
      %p114 = por %p112, %p113
      %s116 = sadd.s32 %s115, 1
      %p119 = scmp.eq.s32.totalorder %s18, 1
      %p120 = scmp.ne.s32.totalorder %s115, %s117
      %p121 = scmp.eq.s32.totalorder %s18, 0
      %p122 = por %p120, %p121
      %p123 = scmp.ne.s32.totalorder %s115, %s117
      %p124 = scmp.eq.s32.totalorder %s23, 1
      %p125 = por %p123, %p124
      %p126 = scmp.ne.s32.totalorder %s117, %s118
      %p127 = scmp.eq.s32.totalorder %s23, 0
      %p128 = por %p126, %p127
      %p129 = scmp.ne.s32.totalorder %s117, %s118
      %p130 = scmp.eq.s32.totalorder %s24, 1
      %p131 = por %p129, %p130
      %p133 = scmp.ne.s32.totalorder %s118, %s132
      %p134 = scmp.eq.s32.totalorder %s24, 0
      %p135 = por %p133, %p134
      %s136 = ssub.s32 %s18, %s25
      %p137 = scmp.eq.s32.totalorder %s136, 0
      %s139 = sadd.s32 %s138, 1
      %s140 = scalar_select %p137, %s138, %s139
      %p143 = pneg %p137
      %p144 = scmp.eq.s32.totalorder %s18, 1
      %p145 = por %p143, %p144
      %p146 = scmp.ne.s32.totalorder %s138, %s141
      %p147 = scmp.eq.s32.totalorder %s18, 0
      %p148 = por %p146, %p147
      %p149 = scmp.ne.s32.totalorder %s138, %s141
      %p150 = scmp.eq.s32.totalorder %s23, 1
      %p151 = por %p149, %p150
      %p152 = scmp.ne.s32.totalorder %s141, %s142
      %p153 = scmp.eq.s32.totalorder %s23, 0
      %p154 = por %p152, %p153
      %p155 = scmp.ne.s32.totalorder %s141, %s142
      %p156 = scmp.eq.s32.totalorder %s24, 1
      %p157 = por %p155, %p156
      %p159 = scmp.ne.s32.totalorder %s142, %s158
      %p160 = scmp.eq.s32.totalorder %s24, 0
      %p161 = por %p159, %p160
      %p162 = scmp.le.s32.totalorder 1, %s18
      %p163 = scmp.lt.s32.totalorder %s18, 3
      %p164 = pnand %p162, %p163
      %p165 = pneg %p164
      // Predicated region
      $region9: #{encoder_forward_channel_major.1} parent=5 // pred_check
        _
      $region10: #{encoder_forward_channel_major.1} parent=5 // pred_check_branch
        %167 = sbr.rel (%p164) target = $region12
      $region11: #{encoder_forward_channel_major.1} parent=5 // pred_region
        %s168 = ssub.s32 %s18, 1
        // Predicated region
        $region13: #{encoder_forward_channel_major.1} parent=11 // pred_check
          %p169 = pneg %p65
        $region14: #{encoder_forward_channel_major.1} parent=11 // pred_check_branch
          %171 = sbr.rel (%p169) target = $region16
        $region15: #{encoder_forward_channel_major.1} parent=11 // pred_region
          _
        $region16: #{encoder_forward_channel_major.1} parent=11 // pred_fallthru
          _
        // Predicated region
        $region17: #{encoder_forward_channel_major.1} parent=11 // pred_check
          %p172 = pneg %p86
        $region18: #{encoder_forward_channel_major.1} parent=11 // pred_check_branch
          %174 = sbr.rel (%p172) target = $region20
        $region19: #{encoder_forward_channel_major.1} parent=11 // pred_region
          _
        $region20: #{encoder_forward_channel_major.1} parent=11 // pred_fallthru
          _
        // Predicated region
        $region21: #{encoder_forward_channel_major.1} parent=11 // pred_check
          %p175 = pneg %p107
        $region22: #{encoder_forward_channel_major.1} parent=11 // pred_check_branch
          %177 = sbr.rel (%p175) target = $region24
        $region23: #{encoder_forward_channel_major.1} parent=11 // pred_region
          _
        $region24: #{encoder_forward_channel_major.1} parent=11 // pred_fallthru
          _
        // Predicated region
        $region25: #{encoder_forward_channel_major.1} parent=11 // pred_check
          %p178 = pneg %p128
        $region26: #{encoder_forward_channel_major.1} parent=11 // pred_check_branch
          %180 = sbr.rel (%p178) target = $region28
        $region27: #{encoder_forward_channel_major.1} parent=11 // pred_region
          %s182 = ssub.s32 16, 16
          %183 = vsyncadd [#allocation5], %s182
          %s185 = sshll.u32 %s4, 4
          %s186 = int_to_ptr.vmem [resolvable:$true] %s185
          %188 = dma.vmem_to_smem %s186, 16, [#allocation6], [#allocation5]
        $region28: #{encoder_forward_channel_major.1} parent=11 // pred_fallthru
          _
      $region12: #{encoder_forward_channel_major.1} parent=5 // pred_fallthru
        _
      %p189 = scmp.lt.s32.totalorder %s18, 2
      // Predicated region
      $region29: #{encoder_forward_channel_major.1} parent=5 // pred_check
        %p190 = pneg %p189
      $region30: #{encoder_forward_channel_major.1} parent=5 // pred_check_branch
        %192 = sbr.rel (%p190) target = $region32
      $region31: #{encoder_forward_channel_major.1} parent=5 // pred_region
        // Predicated region
        $region33: #{encoder_forward_channel_major.1} parent=31 // pred_check
          %p193 = pneg %p38
        $region34: #{encoder_forward_channel_major.1} parent=31 // pred_check_branch
          %195 = sbr.rel (%p193) target = $region36
        $region35: #{encoder_forward_channel_major.1} parent=31 // pred_region
          %s196 = sand.u32 %s28, 1
          %s197 = scalar_lea.sflag [#allocation3], %s196
          %s198 = sand.u32 %s28, 1
          %s199 = smul.addr %s198, 64
          %s200 = scalar_lea.vmem [#allocation2], %s199
          %s201 = smul.u32 2, %s18
          %s203 = ssub.s32 1024, 1024
          %204 = vsyncadd %s197, %s203
          %s205 = smul.addr %s201, 4
          %s206 = smul.addr %s205, 128
          %s207 = scalar_lea.hbm %s0, %s206
          %s208 = sshll.u32 %s200, 4
          %s209 = int_to_ptr.vmem [resolvable:$true] %s208
          %214 = dma.hbm_to_vmem [thread:$0]  %s207, 1024, %s209, %s197, 256, 256, 16
        $region36: #{encoder_forward_channel_major.1} parent=31 // pred_fallthru
          _
      $region32: #{encoder_forward_channel_major.1} parent=5 // pred_fallthru
        _
      %p215 = scmp.le.s32.totalorder 1, %s18
      %p216 = scmp.lt.s32.totalorder %s18, 3
      %p217 = pnand %p215, %p216
      %p218 = pneg %p217
      // Predicated region
      $region37: #{encoder_forward_channel_major.1} parent=5 // pred_check
        _
      $region38: #{encoder_forward_channel_major.1} parent=5 // pred_check_branch
        %220 = sbr.rel (%p217) target = $region40
      $region39: #{encoder_forward_channel_major.1} parent=5 // pred_region
        %s221 = ssub.s32 %s18, 1
        %s222 = sand.u32 %s31, 1
        %s223 = scalar_lea.sflag [#allocation3], %s222
        %s224 = sand.u32 %s31, 1
        %s225 = smul.addr %s224, 64
        %s226 = scalar_lea.vmem [#allocation2], %s225
        // Predicated region
        $region41: #{encoder_forward_channel_major.1} parent=39 // pred_check
          %p227 = pneg %p44
        $region42: #{encoder_forward_channel_major.1} parent=39 // pred_check_branch
          %229 = sbr.rel (%p227) target = $region44
        $region43: #{encoder_forward_channel_major.1} parent=39 // pred_region
          %230 = dma.done %s223, 1024
        $region44: #{encoder_forward_channel_major.1} parent=39 // pred_fallthru
          _
        // Predicated region
        $region45: #{encoder_forward_channel_major.1} parent=39 // pred_check
          %p231 = pneg %p128
        $region46: #{encoder_forward_channel_major.1} parent=39 // pred_check_branch
          %233 = sbr.rel (%p231) target = $region48
        $region47: #{encoder_forward_channel_major.1} parent=39 // pred_region
          %234 = dma.done [#allocation5], 16
        $region48: #{encoder_forward_channel_major.1} parent=39 // pred_fallthru
          _
        %235 = sfence
        %s236 = sand.u32 %s31, 1
        %s237 = scalar_lea.sflag [#allocation3], %s236
        %s238 = sand.u32 %s31, 1
        %s239 = smul.addr %s238, 64
        %s240 = scalar_lea.vmem [#allocation2], %s239
        %p241 = pneg %p44
        %p242 = pneg %p41
        %p243 = pneg %p65
        %p244 = pneg %p62
        %p245 = pneg %p86
        %p246 = pneg %p83
        %p247 = pneg %p107
        %p248 = pneg %p104
        %p249 = pneg %p128
        %p250 = pneg %p125
        %p251 = pneg %p154
        %p252 = pneg %p151
        %s253 = sand.u32 %s141, 1
        %s254 = scalar_lea.sflag [#allocation4], %s253
        %s255 = sand.u32 %s141, 1
        %s256 = smul.addr %s255, 32
        %s257 = scalar_lea.vmem [#allocation7], %s256
        %s258 = smul.u32 2, %s23
        %s259 = smul.u32 2, %s23
        %s260 = smul.u32 %s23, 2
        %v261 = vld [vmem:[%s1] sm:$0xff]
        %v262 = vld [vmem:[%s1 + $0x8] sm:$0xf]
        %v263 = vld [vmem:[%s226] sm:$0xff]
        %v264 = vld [vmem:[%s226 + $0x8] sm:$0xff]
        %v265 = vld [vmem:[%s226 + $0x10] sm:$0xff]
        %v266 = vld [vmem:[%s226 + $0x18] sm:$0xff]
        %v267 = vld [vmem:[%s3] sm:$0xff]
        %v268 = vld [vmem:[%s3 + $0x8] sm:$0xf]
        %270 = vset.pattern.permute.xlu0 0
        %271 = vperm.xlu0 %270, %v267
        %v272 = vpop.permute.xlu0 %271
        %275 = vset.pattern.permute.xlu0 0
        %276 = vperm.xlu0 %275, %v268
        %v277 = vpop.permute.xlu0 %276
        %vm279 = vcmask 130048
        %v281 = vsel %vm279, %v261, 0
        %v284 = vsel %vm279, %v262, 0
        %286 = vmatprep.subr.mxu0 %v264
        %287 = vmatpush1.msra.mxu0 %v263
        %288 = vmatprep.subr.mxu0 %v266
        %289 = vmatpush1.msra.mxu0 %v265
        %290 = vmatprep.subr.mxu0 0.0
        %291 = vmatpush1.msra.mxu0 0.0
        %292 = vmatprep.subr.mxu0 0.0
        %293 = vmatpush1.msra.mxu0 0.0
        %294 = vmatprep.subr.mxu0 0.0
        %295 = vmatpush1.msra.mxu0 0.0
        %296 = vmatprep.subr.mxu0 0.0
        %297 = vmatpush1.msra.mxu0 0.0
        %298 = vmatprep.subr.mxu0 0.0
        %299 = vmatpush1.msra.mxu0 0.0
        %300 = vmatprep.subr.mxu0 0.0
        %301 = vmatpush1.msra.mxu0 0.0
        %302 = vmatprep.subr.mxu0 0.0
        %303 = vmatpush1.msra.mxu0 0.0
        %304 = vmatprep.subr.mxu0 0.0
        %305 = vmatpush1.msra.mxu0 0.0
        %306 = vmatprep.subr.mxu0 0.0
        %307 = vmatpush1.msra.mxu0 0.0
        %308 = vmatprep.subr.mxu0 0.0
        %309 = vmatpush1.msra.mxu0 0.0
        %310 = vmatprep.subr.mxu0 0.0
        %311 = vmatpush1.msra.mxu0 0.0
        %312 = vmatprep.subr.mxu0 0.0
        %313 = vmatpush1.msra.mxu0 0.0
        %314 = vmatprep.subr.mxu0 0.0
        %315 = vmatpush1.msra.mxu0 0.0
        %316 = vmatprep.subr.mxu0 0.0
        %317 = vmatpush1.msra.mxu0 0.0
        %318 = vmatprep.subr.mxu0 0.0
        %319 = vmatpush1.msra.mxu0 0.0
        %320 = vmatprep.subr.mxu0 0.0
        %321 = vmatpush1.msra.mxu0 0.0
        %322 = vmatprep.subr.mxu0 0.0
        %323 = vmatpush1.msra.mxu0 0.0
        %324 = vmatprep.subr.mxu0 0.0
        %325 = vmatpush1.msra.mxu0 0.0
        %326 = vmatprep.subr.mxu0 0.0
        %327 = vmatpush1.msra.mxu0 0.0
        %328 = vmatprep.subr.mxu0 0.0
        %329 = vmatpush1.msra.mxu0 0.0
        %330 = vmatprep.subr.mxu0 0.0
        %331 = vmatpush1.msra.mxu0 0.0
        %332 = vmatprep.subr.mxu0 0.0
        %333 = vmatpush1.msra.mxu0 0.0
        %334 = vmatprep.subr.mxu0 0.0
        %335 = vmatpush1.msra.mxu0 0.0
        %336 = vmatprep.subr.mxu0 0.0
        %337 = vmatpush1.msra.mxu0 0.0
        %338 = vmatprep.subr.mxu0 0.0
        %339 = vmatpush1.msra.mxu0 0.0
        %340 = vmatprep.subr.mxu0 0.0
        %341 = vmatpush1.msra.mxu0 0.0
        %342 = vmatprep.subr.mxu0 0.0
        %343 = vmatpush1.msra.mxu0 0.0
        %344 = vmatprep.subr.mxu0 0.0
        %345 = vmatpush1.msra.mxu0 0.0
        %346 = vmatprep.subr.mxu0 0.0
        %347 = vmatpush1.msra.mxu0 0.0
        %348 = vmatprep.subr.mxu0 0.0
        %349 = vmatpush1.msra.mxu0 0.0
        %350 = vmatprep.mubr.f32.mxu0 0.0
        %351 = vmatmul.mubr.f32.gmra.mrb[0].mxu0 %v281
        %v352 = vpop.f32.mrb[0].mxu0
        %v353 = vadd.f32 %v272, %v352
        %v354 = vpop.f32.mrb[0].mxu0
        %v355 = vadd.f32 %v272, %v354
        %356 = vmatprep.mubr.f32.mxu0 0.0
        %357 = vmatmul.mubr.f32.gmra.mrb[0].mxu0 %v284
        %v358 = vpop.f32.mrb[0].mxu0
        %v359 = vadd.f32 %v277, %v358
        %v360 = vpop.f32.mrb[0].mxu0
        %v361 = vadd.f32 %v277, %v360
        %362 = vdwg.mxu0
        %v363 = vadd.f32 %v353, %v355
        %vm364 = vcmask 1043456
        %v365 = vsel %vm364, %v359, 0.0
        %v366 = vadd.f32 %v363, %v365
        %v367 = vsel %vm364, %v361, 0.0
        %v368 = vadd.f32 %v366, %v367
        %369 = vadd.xlane.f32.xlu0 %v368
        %v370 = vpop.xlane.xlu0 %369
        %v371 = vrot.slane %v370, 4
        %v372 = vadd.f32 %v370, %v371
        %v373 = vrot.slane %v372, 2
        %v374 = vadd.f32 %v372, %v373
        %v375 = vrot.slane %v374, 1
        %v376 = vadd.f32 %v374, %v375
        %s377 = vtos %v376
        %v378 = vstv %s377
        %v379 = vrcp.pop 3072.0
        %v380 = vmul.f32 %v378, %v379
        %v381 = vsub.f32 %v353, %v380
        %v382 = vsub.f32 %v355, %v380
        %v383 = vsub.f32 %v359, %v380
        %v384 = vsub.f32 %v361, %v380
        %v385 = vmul.f32 %v381, %v381
        %v386 = vmul.f32 %v382, %v382
        %v387 = vmul.f32 %v383, %v383
        %v388 = vmul.f32 %v384, %v384
        %v389 = vadd.f32 %v385, %v386
        %v390 = vsel %vm364, %v387, 0.0
        %v391 = vadd.f32 %v389, %v390
        %v392 = vsel %vm364, %v388, 0.0
        %v393 = vadd.f32 %v391, %v392
        %394 = vadd.xlane.f32.xlu0 %v393
        %v395 = vpop.xlane.xlu0 %394
        %v396 = vrot.slane %v395, 4
        %v397 = vadd.f32 %v395, %v396
        %v398 = vrot.slane %v397, 2
        %v399 = vadd.f32 %v397, %v398
        %v400 = vrot.slane %v399, 1
        %v401 = vadd.f32 %v399, %v400
        %s402 = vtos %v401
        %v403 = vstv %s402
        %v404 = vmul.f32 %v403, %v379
        %s405 = sld [smem:[#allocation6 + %s260]]
        %v406 = vadd.f32 %v404, 1e-05
        %v407 = vrsqrt.pop %v406
        %v408 = vstv %s405
        %v409 = vmul.f32 %v408, %v407
        %v410 = vmul.f32 %v381, %v409
        %v411 = vmul.f32 %v382, %v409
        %v412 = vmul.f32 %v383, %v409
        %v413 = vmul.f32 %v384, %v409
        %s414 = sadd.s32 %s260, 4
        %s415 = sld [smem:[#allocation6 + %s414]]
        %v416 = vstv %s415
        %v417 = vadd.f32 %v410, %v416
        %v418 = vadd.f32 %v411, %v416
        %v419 = vadd.f32 %v412, %v416
        %v420 = vadd.f32 %v413, %v416
        %v421 = vtanh.pop %v417
        %v422 = vtanh.pop %v418
        %v423 = vtanh.pop %v419
        %v424 = vtanh.pop %v420
        %v425 = vld [vmem:[%s2] sm:$0xff]
        %v426 = vld [vmem:[%s3] sm:$0xff]
        %428 = vset.pattern.permute.xlu0 1
        %429 = vperm.xlu0 %428, %v426
        %v430 = vpop.permute.xlu0 %429
        %vm432 = vcmask 97280
        %v434 = vsel %vm432, %v425, 0
        %v437 = vsel %vm364, %v423, 0
        %v440 = vsel %vm364, %v424, 0
        %442 = vmatprep.subr.mxu0 %v422
        %443 = vmatpush1.msra.mxu0 %v421
        %444 = vmatprep.subr.mxu0 %v440
        %445 = vmatpush1.msra.mxu0 %v437
        %446 = vmatprep.subr.mxu0 0.0
        %447 = vmatpush1.msra.mxu0 0.0
        %448 = vmatprep.subr.mxu0 0.0
        %449 = vmatpush1.msra.mxu0 0.0
        %450 = vmatprep.subr.mxu0 0.0
        %451 = vmatpush1.msra.mxu0 0.0
        %452 = vmatprep.subr.mxu0 0.0
        %453 = vmatpush1.msra.mxu0 0.0
        %454 = vmatprep.subr.mxu0 0.0
        %455 = vmatpush1.msra.mxu0 0.0
        %456 = vmatprep.subr.mxu0 0.0
        %457 = vmatpush1.msra.mxu0 0.0
        %458 = vmatprep.subr.mxu0 0.0
        %459 = vmatpush1.msra.mxu0 0.0
        %460 = vmatprep.subr.mxu0 0.0
        %461 = vmatpush1.msra.mxu0 0.0
        %462 = vmatprep.subr.mxu0 0.0
        %463 = vmatpush1.msra.mxu0 0.0
        %464 = vmatprep.subr.mxu0 0.0
        %465 = vmatpush1.msra.mxu0 0.0
        %466 = vmatprep.subr.mxu0 0.0
        %467 = vmatpush1.msra.mxu0 0.0
        %468 = vmatprep.subr.mxu0 0.0
        %469 = vmatpush1.msra.mxu0 0.0
        %470 = vmatprep.subr.mxu0 0.0
        %471 = vmatpush1.msra.mxu0 0.0
        %472 = vmatprep.subr.mxu0 0.0
        %473 = vmatpush1.msra.mxu0 0.0
        %474 = vmatprep.subr.mxu0 0.0
        %475 = vmatpush1.msra.mxu0 0.0
        %476 = vmatprep.subr.mxu0 0.0
        %477 = vmatpush1.msra.mxu0 0.0
        %478 = vmatprep.subr.mxu0 0.0
        %479 = vmatpush1.msra.mxu0 0.0
        %480 = vmatprep.subr.mxu0 0.0
        %481 = vmatpush1.msra.mxu0 0.0
        %482 = vmatprep.subr.mxu0 0.0
        %483 = vmatpush1.msra.mxu0 0.0
        %484 = vmatprep.subr.mxu0 0.0
        %485 = vmatpush1.msra.mxu0 0.0
        %486 = vmatprep.subr.mxu0 0.0
        %487 = vmatpush1.msra.mxu0 0.0
        %488 = vmatprep.subr.mxu0 0.0
        %489 = vmatpush1.msra.mxu0 0.0
        %490 = vmatprep.subr.mxu0 0.0
        %491 = vmatpush1.msra.mxu0 0.0
        %492 = vmatprep.subr.mxu0 0.0
        %493 = vmatpush1.msra.mxu0 0.0
        %494 = vmatprep.subr.mxu0 0.0
        %495 = vmatpush1.msra.mxu0 0.0
        %496 = vmatprep.subr.mxu0 0.0
        %497 = vmatpush1.msra.mxu0 0.0
        %498 = vmatprep.subr.mxu0 0.0
        %499 = vmatpush1.msra.mxu0 0.0
        %500 = vmatprep.subr.mxu0 0.0
        %501 = vmatpush1.msra.mxu0 0.0
        %502 = vmatprep.subr.mxu0 0.0
        %503 = vmatpush1.msra.mxu0 0.0
        %504 = vmatprep.subr.mxu0 0.0
        %505 = vmatpush1.msra.mxu0 0.0
        %506 = vmatprep.mubr.f32.mxu0 0.0
        %507 = vmatmul.mubr.f32.gmra.mrb[0].mxu0 %v434
        %v508 = vpop.f32.mrb[0].mxu0
        %v509 = vadd.f32 %v430, %v508
        %v510 = vpop.f32.mrb[0].mxu0
        %v511 = vadd.f32 %v430, %v510
        %512 = vdwg.mxu0
        %v513 = vadd.f32 %v509, %v511
        %514 = vadd.xlane.f32.xlu0 %v513
        %v515 = vpop.xlane.xlu0 %514
        %v516 = vrot.slane %v515, 4
        %v517 = vadd.f32 %v515, %v516
        %v518 = vrot.slane %v517, 2
        %v519 = vadd.f32 %v517, %v518
        %v520 = vrot.slane %v519, 1
        %v521 = vadd.f32 %v519, %v520
        %s522 = vtos %v521
        %v523 = vstv %s522
        %v524 = vrcp.pop 2048.0
        %v525 = vmul.f32 %v523, %v524
        %v526 = vsub.f32 %v509, %v525
        %v527 = vsub.f32 %v511, %v525
        %v528 = vmul.f32 %v526, %v526
        %v529 = vmul.f32 %v527, %v527
        %v530 = vadd.f32 %v528, %v529
        %531 = vadd.xlane.f32.xlu0 %v530
        %v532 = vpop.xlane.xlu0 %531
        %v533 = vrot.slane %v532, 4
        %v534 = vadd.f32 %v532, %v533
        %v535 = vrot.slane %v534, 2
        %v536 = vadd.f32 %v534, %v535
        %v537 = vrot.slane %v536, 1
        %v538 = vadd.f32 %v536, %v537
        %s539 = vtos %v538
        %v540 = vstv %s539
        %v541 = vmul.f32 %v540, %v524
        %s542 = sadd.s32 %s260, 8
        %s543 = sld [smem:[#allocation6 + %s542]]
        %v544 = vadd.f32 %v541, 1e-05
        %v545 = vrsqrt.pop %v544
        %v546 = vstv %s543
        %v547 = vmul.f32 %v546, %v545
        %v548 = vmul.f32 %v526, %v547
        %v549 = vmul.f32 %v527, %v547
        %s550 = sadd.s32 %s260, 12
        %s551 = sld [smem:[#allocation6 + %s550]]
        %v552 = vstv %s551
        %v553 = vadd.f32 %v548, %v552
        %v554 = vadd.f32 %v549, %v552
        %v555 = vmax.f32 %v553, 0.0
        %v556 = vmax.f32 %v554, 0.0
        %557 = vst [vmem:[%s257] sm:$0xff] %v555
        %558 = vst [vmem:[%s257 + $0x8] sm:$0xff] %v556
        %s559 = sadd.s32 %s260, 1
        %v560 = vld [vmem:[%s1] sm:$0xff]
        %v561 = vld [vmem:[%s1 + $0x8] sm:$0xf]
        %s562 = scalar_lea.vmem %s226, 32 [#allocation2]
        %v563 = vld [vmem:[%s562] sm:$0xff]
        %v564 = vld [vmem:[%s562 + $0x8] sm:$0xff]
        %v565 = vld [vmem:[%s562 + $0x10] sm:$0xff]
        %v566 = vld [vmem:[%s562 + $0x18] sm:$0xff]
        %v567 = vld [vmem:[%s3] sm:$0xff]
        %v568 = vld [vmem:[%s3 + $0x8] sm:$0xf]
        %570 = vset.pattern.permute.xlu0 0
        %571 = vperm.xlu0 %570, %v567
        %v572 = vpop.permute.xlu0 %571
        %575 = vset.pattern.permute.xlu0 0
        %576 = vperm.xlu0 %575, %v568
        %v577 = vpop.permute.xlu0 %576
        %v580 = vsel %vm279, %v560, 0
        %v583 = vsel %vm279, %v561, 0
        %585 = vmatprep.subr.mxu0 %v564
        %586 = vmatpush1.msra.mxu0 %v563
        %587 = vmatprep.subr.mxu0 %v566
        %588 = vmatpush1.msra.mxu0 %v565
        %589 = vmatprep.subr.mxu0 0.0
        %590 = vmatpush1.msra.mxu0 0.0
        %591 = vmatprep.subr.mxu0 0.0
        %592 = vmatpush1.msra.mxu0 0.0
        %593 = vmatprep.subr.mxu0 0.0
        %594 = vmatpush1.msra.mxu0 0.0
        %595 = vmatprep.subr.mxu0 0.0
        %596 = vmatpush1.msra.mxu0 0.0
        %597 = vmatprep.subr.mxu0 0.0
        %598 = vmatpush1.msra.mxu0 0.0
        %599 = vmatprep.subr.mxu0 0.0
        %600 = vmatpush1.msra.mxu0 0.0
        %601 = vmatprep.subr.mxu0 0.0
        %602 = vmatpush1.msra.mxu0 0.0
        %603 = vmatprep.subr.mxu0 0.0
        %604 = vmatpush1.msra.mxu0 0.0
        %605 = vmatprep.subr.mxu0 0.0
        %606 = vmatpush1.msra.mxu0 0.0
        %607 = vmatprep.subr.mxu0 0.0
        %608 = vmatpush1.msra.mxu0 0.0
        %609 = vmatprep.subr.mxu0 0.0
        %610 = vmatpush1.msra.mxu0 0.0
        %611 = vmatprep.subr.mxu0 0.0
        %612 = vmatpush1.msra.mxu0 0.0
        %613 = vmatprep.subr.mxu0 0.0
        %614 = vmatpush1.msra.mxu0 0.0
        %615 = vmatprep.subr.mxu0 0.0
        %616 = vmatpush1.msra.mxu0 0.0
        %617 = vmatprep.subr.mxu0 0.0
        %618 = vmatpush1.msra.mxu0 0.0
        %619 = vmatprep.subr.mxu0 0.0
        %620 = vmatpush1.msra.mxu0 0.0
        %621 = vmatprep.subr.mxu0 0.0
        %622 = vmatpush1.msra.mxu0 0.0
        %623 = vmatprep.subr.mxu0 0.0
        %624 = vmatpush1.msra.mxu0 0.0
        %625 = vmatprep.subr.mxu0 0.0
        %626 = vmatpush1.msra.mxu0 0.0
        %627 = vmatprep.subr.mxu0 0.0
        %628 = vmatpush1.msra.mxu0 0.0
        %629 = vmatprep.subr.mxu0 0.0
        %630 = vmatpush1.msra.mxu0 0.0
        %631 = vmatprep.subr.mxu0 0.0
        %632 = vmatpush1.msra.mxu0 0.0
        %633 = vmatprep.subr.mxu0 0.0
        %634 = vmatpush1.msra.mxu0 0.0
        %635 = vmatprep.subr.mxu0 0.0
        %636 = vmatpush1.msra.mxu0 0.0
        %637 = vmatprep.subr.mxu0 0.0
        %638 = vmatpush1.msra.mxu0 0.0
        %639 = vmatprep.subr.mxu0 0.0
        %640 = vmatpush1.msra.mxu0 0.0
        %641 = vmatprep.subr.mxu0 0.0
        %642 = vmatpush1.msra.mxu0 0.0
        %643 = vmatprep.subr.mxu0 0.0
        %644 = vmatpush1.msra.mxu0 0.0
        %645 = vmatprep.subr.mxu0 0.0
        %646 = vmatpush1.msra.mxu0 0.0
        %647 = vmatprep.subr.mxu0 0.0
        %648 = vmatpush1.msra.mxu0 0.0
        %649 = vmatprep.mubr.f32.mxu0 0.0
        %650 = vmatmul.mubr.f32.gmra.mrb[0].mxu0 %v580
        %v651 = vpop.f32.mrb[0].mxu0
        %v652 = vadd.f32 %v572, %v651
        %v653 = vpop.f32.mrb[0].mxu0
        %v654 = vadd.f32 %v572, %v653
        %655 = vmatprep.mubr.f32.mxu0 0.0
        %656 = vmatmul.mubr.f32.gmra.mrb[0].mxu0 %v583
        %v657 = vpop.f32.mrb[0].mxu0
        %v658 = vadd.f32 %v577, %v657
        %v659 = vpop.f32.mrb[0].mxu0
        %v660 = vadd.f32 %v577, %v659
        %661 = vdwg.mxu0
        %v662 = vadd.f32 %v652, %v654
        %v663 = vsel %vm364, %v658, 0.0
        %v664 = vadd.f32 %v662, %v663
        %v665 = vsel %vm364, %v660, 0.0
        %v666 = vadd.f32 %v664, %v665
        %667 = vadd.xlane.f32.xlu0 %v666
        %v668 = vpop.xlane.xlu0 %667
        %v669 = vrot.slane %v668, 4
        %v670 = vadd.f32 %v668, %v669
        %v671 = vrot.slane %v670, 2
        %v672 = vadd.f32 %v670, %v671
        %v673 = vrot.slane %v672, 1
        %v674 = vadd.f32 %v672, %v673
        %s675 = vtos %v674
        %v676 = vstv %s675
        %v677 = vmul.f32 %v676, %v379
        %v678 = vsub.f32 %v652, %v677
        %v679 = vsub.f32 %v654, %v677
        %v680 = vsub.f32 %v658, %v677
        %v681 = vsub.f32 %v660, %v677
        %v682 = vmul.f32 %v678, %v678
        %v683 = vmul.f32 %v679, %v679
        %v684 = vmul.f32 %v680, %v680
        %v685 = vmul.f32 %v681, %v681
        %v686 = vadd.f32 %v682, %v683
        %v687 = vsel %vm364, %v684, 0.0
        %v688 = vadd.f32 %v686, %v687
        %v689 = vsel %vm364, %v685, 0.0
        %v690 = vadd.f32 %v688, %v689
        %691 = vadd.xlane.f32.xlu0 %v690
        %v692 = vpop.xlane.xlu0 %691
        %v693 = vrot.slane %v692, 4
        %v694 = vadd.f32 %v692, %v693
        %v695 = vrot.slane %v694, 2
        %v696 = vadd.f32 %v694, %v695
        %v697 = vrot.slane %v696, 1
        %v698 = vadd.f32 %v696, %v697
        %s699 = vtos %v698
        %v700 = vstv %s699
        %v701 = vmul.f32 %v700, %v379
        %s702 = sld [smem:[#allocation6 + %s559]]
        %v703 = vadd.f32 %v701, 1e-05
        %v704 = vrsqrt.pop %v703
        %v705 = vstv %s702
        %v706 = vmul.f32 %v705, %v704
        %v707 = vmul.f32 %v678, %v706
        %v708 = vmul.f32 %v679, %v706
        %v709 = vmul.f32 %v680, %v706
        %v710 = vmul.f32 %v681, %v706
        %s711 = sadd.s32 %s260, 5
        %s712 = sld [smem:[#allocation6 + %s711]]
        %v713 = vstv %s712
        %v714 = vadd.f32 %v707, %v713
        %v715 = vadd.f32 %v708, %v713
        %v716 = vadd.f32 %v709, %v713
        %v717 = vadd.f32 %v710, %v713
        %v718 = vtanh.pop %v714
        %v719 = vtanh.pop %v715
        %v720 = vtanh.pop %v716
        %v721 = vtanh.pop %v717
        %v722 = vld [vmem:[%s2] sm:$0xff]
        %v723 = vld [vmem:[%s3] sm:$0xff]
        %725 = vset.pattern.permute.xlu0 1
        %726 = vperm.xlu0 %725, %v723
        %v727 = vpop.permute.xlu0 %726
        %v730 = vsel %vm432, %v722, 0
        %v733 = vsel %vm364, %v720, 0
        %v736 = vsel %vm364, %v721, 0
        %738 = vmatprep.subr.mxu0 %v719
        %739 = vmatpush1.msra.mxu0 %v718
        %740 = vmatprep.subr.mxu0 %v736
        %741 = vmatpush1.msra.mxu0 %v733
        %742 = vmatprep.subr.mxu0 0.0
        %743 = vmatpush1.msra.mxu0 0.0
        %744 = vmatprep.subr.mxu0 0.0
        %745 = vmatpush1.msra.mxu0 0.0
        %746 = vmatprep.subr.mxu0 0.0
        %747 = vmatpush1.msra.mxu0 0.0
        %748 = vmatprep.subr.mxu0 0.0
        %749 = vmatpush1.msra.mxu0 0.0
        %750 = vmatprep.subr.mxu0 0.0
        %751 = vmatpush1.msra.mxu0 0.0
        %752 = vmatprep.subr.mxu0 0.0
        %753 = vmatpush1.msra.mxu0 0.0
        %754 = vmatprep.subr.mxu0 0.0
        %755 = vmatpush1.msra.mxu0 0.0
        %756 = vmatprep.subr.mxu0 0.0
        %757 = vmatpush1.msra.mxu0 0.0
        %758 = vmatprep.subr.mxu0 0.0
        %759 = vmatpush1.msra.mxu0 0.0
        %760 = vmatprep.subr.mxu0 0.0
        %761 = vmatpush1.msra.mxu0 0.0
        %762 = vmatprep.subr.mxu0 0.0
        %763 = vmatpush1.msra.mxu0 0.0
        %764 = vmatprep.subr.mxu0 0.0
        %765 = vmatpush1.msra.mxu0 0.0
        %766 = vmatprep.subr.mxu0 0.0
        %767 = vmatpush1.msra.mxu0 0.0
        %768 = vmatprep.subr.mxu0 0.0
        %769 = vmatpush1.msra.mxu0 0.0
        %770 = vmatprep.subr.mxu0 0.0
        %771 = vmatpush1.msra.mxu0 0.0
        %772 = vmatprep.subr.mxu0 0.0
        %773 = vmatpush1.msra.mxu0 0.0
        %774 = vmatprep.subr.mxu0 0.0
        %775 = vmatpush1.msra.mxu0 0.0
        %776 = vmatprep.subr.mxu0 0.0
        %777 = vmatpush1.msra.mxu0 0.0
        %778 = vmatprep.subr.mxu0 0.0
        %779 = vmatpush1.msra.mxu0 0.0
        %780 = vmatprep.subr.mxu0 0.0
        %781 = vmatpush1.msra.mxu0 0.0
        %782 = vmatprep.subr.mxu0 0.0
        %783 = vmatpush1.msra.mxu0 0.0
        %784 = vmatprep.subr.mxu0 0.0
        %785 = vmatpush1.msra.mxu0 0.0
        %786 = vmatprep.subr.mxu0 0.0
        %787 = vmatpush1.msra.mxu0 0.0
        %788 = vmatprep.subr.mxu0 0.0
        %789 = vmatpush1.msra.mxu0 0.0
        %790 = vmatprep.subr.mxu0 0.0
        %791 = vmatpush1.msra.mxu0 0.0
        %792 = vmatprep.subr.mxu0 0.0
        %793 = vmatpush1.msra.mxu0 0.0
        %794 = vmatprep.subr.mxu0 0.0
        %795 = vmatpush1.msra.mxu0 0.0
        %796 = vmatprep.subr.mxu0 0.0
        %797 = vmatpush1.msra.mxu0 0.0
        %798 = vmatprep.subr.mxu0 0.0
        %799 = vmatpush1.msra.mxu0 0.0
        %800 = vmatprep.subr.mxu0 0.0
        %801 = vmatpush1.msra.mxu0 0.0
        %802 = vmatprep.mubr.f32.mxu0 0.0
        %803 = vmatmul.mubr.f32.gmra.mrb[0].mxu0 %v730
        %v804 = vpop.f32.mrb[0].mxu0
        %v805 = vadd.f32 %v727, %v804
        %v806 = vpop.f32.mrb[0].mxu0
        %v807 = vadd.f32 %v727, %v806
        %808 = vdwg.mxu0
        %v809 = vadd.f32 %v805, %v807
        %810 = vadd.xlane.f32.xlu0 %v809
        %v811 = vpop.xlane.xlu0 %810
        %v812 = vrot.slane %v811, 4
        %v813 = vadd.f32 %v811, %v812
        %v814 = vrot.slane %v813, 2
        %v815 = vadd.f32 %v813, %v814
        %v816 = vrot.slane %v815, 1
        %v817 = vadd.f32 %v815, %v816
        %s818 = vtos %v817
        %v819 = vstv %s818
        %v820 = vmul.f32 %v819, %v524
        %v821 = vsub.f32 %v805, %v820
        %v822 = vsub.f32 %v807, %v820
        %v823 = vmul.f32 %v821, %v821
        %v824 = vmul.f32 %v822, %v822
        %v825 = vadd.f32 %v823, %v824
        %826 = vadd.xlane.f32.xlu0 %v825
        %v827 = vpop.xlane.xlu0 %826
        %v828 = vrot.slane %v827, 4
        %v829 = vadd.f32 %v827, %v828
        %v830 = vrot.slane %v829, 2
        %v831 = vadd.f32 %v829, %v830
        %v832 = vrot.slane %v831, 1
        %v833 = vadd.f32 %v831, %v832
        %s834 = vtos %v833
        %v835 = vstv %s834
        %v836 = vmul.f32 %v835, %v524
        %s837 = sadd.s32 %s260, 9
        %s838 = sld [smem:[#allocation6 + %s837]]
        %v839 = vadd.f32 %v836, 1e-05
        %v840 = vrsqrt.pop %v839
        %v841 = vstv %s838
        %v842 = vmul.f32 %v841, %v840
        %v843 = vmul.f32 %v821, %v842
        %v844 = vmul.f32 %v822, %v842
        %s845 = sadd.s32 %s260, 13
        %s846 = sld [smem:[#allocation6 + %s845]]
        %v847 = vstv %s846
        %v848 = vadd.f32 %v843, %v847
        %v849 = vadd.f32 %v844, %v847
        %v850 = vmax.f32 %v848, 0.0
        %v851 = vmax.f32 %v849, 0.0
        %s852 = scalar_lea.vmem %s257, 16 [#allocation7]
        %853 = vst [vmem:[%s852] sm:$0xff] %v850
        %854 = vst [vmem:[%s852 + $0x8] sm:$0xff] %v851
        %s855 = sand.u32 %s141, 1
        %s856 = scalar_lea.sflag [#allocation4], %s855
        %s857 = sand.u32 %s141, 1
        %s858 = smul.addr %s857, 32
        %s859 = scalar_lea.vmem [#allocation7], %s858
        // Predicated region
        $region49: #{encoder_forward_channel_major.1} parent=39 // pred_check
          %p860 = pneg %p151
        $region50: #{encoder_forward_channel_major.1} parent=39 // pred_check_branch
          %862 = sbr.rel (%p860) target = $region52
        $region51: #{encoder_forward_channel_major.1} parent=39 // pred_region
          %s863 = smul.u32 2, %s23
          %s865 = ssub.s32 512, 512
          %866 = vsyncadd %s856, %s865
          %s867 = smul.addr %s863, 2
          %s868 = smul.addr %s867, 128
          %s869 = scalar_lea.hbm %s5, %s868
          %s870 = sshll.u32 %s859, 4
          %s871 = int_to_ptr.vmem [resolvable:$true] %s870
          %876 = dma.vmem_to_hbm [thread:$0]  %s871, 512, %s869, %s856, 256, 256, 16
        $region52: #{encoder_forward_channel_major.1} parent=39 // pred_fallthru
          _
      $region40: #{encoder_forward_channel_major.1} parent=5 // pred_fallthru
        _
      %p877 = scmp.le.s32.totalorder 2, %s18
      // Predicated region
      $region53: #{encoder_forward_channel_major.1} parent=5 // pred_check
        %p878 = pneg %p877
      $region54: #{encoder_forward_channel_major.1} parent=5 // pred_check_branch
        %880 = sbr.rel (%p878) target = $region56
      $region55: #{encoder_forward_channel_major.1} parent=5 // pred_region
        %s881 = ssub.s32 %s18, 2
        // Predicated region
        $region57: #{encoder_forward_channel_major.1} parent=55 // pred_check
          %p882 = pneg %p157
        $region58: #{encoder_forward_channel_major.1} parent=55 // pred_check_branch
          %884 = sbr.rel (%p882) target = $region60
        $region59: #{encoder_forward_channel_major.1} parent=55 // pred_region
          %s885 = sand.u32 %s142, 1
          %s886 = scalar_lea.sflag [#allocation4], %s885
          %s887 = sand.u32 %s142, 1
          %s888 = smul.addr %s887, 32
          %s889 = scalar_lea.vmem [#allocation7], %s888
          %890 = dma.done %s886, 512
        $region60: #{encoder_forward_channel_major.1} parent=55 // pred_fallthru
          _
      $region56: #{encoder_forward_channel_major.1} parent=5 // pred_fallthru
        _
    $region6: #{encoder_forward_channel_major.1} parent=1 // loop_footer
      %s22 = sadd.s32 1, %s18
    $region7: #{encoder_forward_channel_major.1} parent=1 // loop_footer_branch
      %17 = sbr.rel target = $region3
    $region8: #{encoder_forward_channel_major.1} parent=1 // loop_exit
      _
    %891 = vsyncpa [#allocation3], 1
    %s892 = scalar_lea.sflag [#allocation3], 1
    %893 = vsyncpa %s892, 1
    %894 = vsyncpa [#allocation4], 1
    %s895 = scalar_lea.sflag [#allocation4], 1
    %896 = vsyncpa %s895, 1
    %897 = vsyncpa [#allocation5], 1
    %s898 = scalar_lea.sflag [#allocation5], 1
    %899 = vsyncpa %s898, 1

</llo_original>
